<compile_context>
chip_gen: v5e
topology: v5e:2x2
jax: 0.10.0
libtpu: 0.0.40
codegen_flags: <defaults>
</compile_context>

<pallas_src>
import functools

import jax
import jax.numpy as jnp
from jax.experimental import pallas as pl
from jax.experimental.pallas import tpu as pltpu


def _round_up(a, b):
    return (a + b - 1) // b * b


def _round_down(a, b):
    return max(b, (a // b) * b)


def _sublane_multiple(dtype):
    # f32 -> 8, bf16 -> 16, int8/fp8 -> 32 (sub-32-bit dtypes pack along sublanes)
    return max(8, 32 // jnp.dtype(dtype).itemsize)


def _tpu_vmem_bytes():
    try:
        return int(pltpu.get_tpu_info().vmem_capacity_bytes)
    except Exception:
        return 128 * 1024 * 1024  # v5e/v6e physical VMEM as a safe fallback


def _num_tensorcores():
    # v7x has 2 TensorCores per chip; v5e/v6e have 1.
    try:
        if "v7" in jax.devices()[0].device_kind.lower():
            return 2
    except Exception:
        pass
    return 1


def layer_norm_kernel(x_ref, g_ref, b_ref, o_ref, *, eps, n_features, n_padded):
    # x block: (Rt, Hp); gamma/beta blocks: (1, Hp); output block: (Rt, Hp)
    x = x_ref[...].astype(jnp.float32)
    g = g_ref[...].astype(jnp.float32)
    b = b_ref[...].astype(jnp.float32)

    if n_padded != n_features:
        # Feature axis was padded to a multiple of 128: mask padded lanes out
        # of the reduction (padded gamma/beta are zero, so padded outputs are 0).
        lane = jax.lax.broadcasted_iota(jnp.int32, x.shape, x.ndim - 1)
        valid = lane < n_features
        xs = jnp.where(valid, x, 0.0)
        mean = jnp.sum(xs, axis=-1, keepdims=True) / n_features
        centered = jnp.where(valid, x - mean, 0.0)
    else:
        mean = jnp.mean(x, axis=-1, keepdims=True)
        centered = x - mean

    # torch .std() is the unbiased estimator: divide by (N - 1).
    # (N == 1 yields 0/0 = NaN, matching torch behavior.)
    var = jnp.sum(centered * centered, axis=-1, keepdims=True) / (n_features - 1)
    d = jnp.sqrt(var) + eps                      # eps added to std (torch semantics)
    r = pl.reciprocal(d, approx=True)            # EUP seed, (Rt,1) column -> ~free
    inv = r * (2.0 - d * r)                      # one Newton step -> ~f32 accuracy

    o_ref[...] = (g * (centered * inv) + b).astype(o_ref.dtype)


def layer_norm(x, gamma, beta, eps=1e-6, target_tile_bytes=8 * 1024 * 1024):
    """LayerNorm over the last axis of x. gamma/beta have shape (features,)."""
    orig_shape = x.shape
    *lead, H = x.shape
    x2 = x.reshape(-1, H)
    R = x2.shape[0]

    # Keep the feature axis lane-dense (multiple of 128) so output stores are
    # unmasked vst. Demo uses H=128, so this branch is a no-op.
    Hp = _round_up(H, 128)
    if Hp != H:
        x2 = jnp.pad(x2, ((0, 0), (0, Hp - H)))
        gamma = jnp.pad(gamma, (0, Hp - H))
        beta = jnp.pad(beta, (0, Hp - H))
    gamma2 = gamma.reshape(1, Hp)
    beta2 = beta.reshape(1, Hp)

    sub = _sublane_multiple(x.dtype)
    row_bytes = Hp * jnp.dtype(x.dtype).itemsize

    # Row tile from a byte budget: ~8 MiB of x per grid step (amortizes the
    # ~0.35us/step overhead), capped so double-buffered in+out tiles
    # (~4 * Rt * row_bytes) fit in ~75% of this generation's VMEM.
    vmem_cap = _tpu_vmem_bytes()                 # 128 MiB v5e/v6e, 64 MiB v7x
    vmem_budget = int(vmem_cap * 0.75)
    rt_target = _round_down(max(target_tile_bytes // row_bytes, sub), sub)
    rt_vmem = _round_down(max(vmem_budget // (4 * row_bytes), sub), sub)
    Rt = max(sub, min(rt_target, rt_vmem, _round_up(R, sub)))

    # Only dual-TensorCore chips (v7x) benefit from forcing >=2 grid steps;
    # on single-TC v5e/v6e keep the largest tile.
    if _num_tensorcores() >= 2 and pl.cdiv(R, Rt) < 2 and R > sub:
        Rt = max(sub, _round_up(pl.cdiv(R, 2), sub))

    # Partial last block instead of jnp.pad/slice: per-row reduction means the
    # garbage rows of the final block never touch valid rows, and their stores
    # are dropped. This kernel must never add a cross-row reduction.
    grid = (pl.cdiv(R, Rt),)

    out = pl.pallas_call(
        functools.partial(layer_norm_kernel, eps=float(eps),
                          n_features=H, n_padded=Hp),
        out_shape=jax.ShapeDtypeStruct((R, Hp), x.dtype),
        grid_spec=pltpu.PrefetchScalarGridSpec(
            num_scalar_prefetch=0,
            grid=grid,
            in_specs=[
                pl.BlockSpec((Rt, Hp), lambda i: (i, 0)),
                pl.BlockSpec((1, Hp), lambda i: (0, 0)),   # constant block: no re-DMA
                pl.BlockSpec((1, Hp), lambda i: (0, 0)),
            ],
            out_specs=pl.BlockSpec((Rt, Hp), lambda i: (i, 0)),
        ),
        compiler_params=pltpu.CompilerParams(
            dimension_semantics=("parallel",),
            vmem_limit_bytes=int(vmem_cap * 0.78),   # ~100 MiB v5e/v6e, ~50 MiB v7x
        ),
    )(x2, gamma2, beta2)

    if Hp != H:
        out = out[:, :H]   # only when features were padded (not in the demo)
    return out.reshape(orig_shape)


def layer_norm_reference(x, gamma, beta, eps=1e-6):
    """Pure-JAX reference matching the PyTorch forward exactly."""
    mean = jnp.mean(x, axis=-1, keepdims=True)
    std = jnp.std(x, axis=-1, keepdims=True, ddof=1)   # unbiased, like torch
    return gamma * (x - mean) / (std + eps) + beta


if __name__ == "__main__":
    B, S, H = 2, 8, 128   # (batch, seq, features); H multiple of 128 => lane-dense stores

    key = jax.random.PRNGKey(0)
    kx, kg, kb = jax.random.split(key, 3)

    x = jax.random.normal(kx, (B, S, H), dtype=jnp.float32)
    # Module inits a_2=ones, b_2=zeros; perturb so the affine part is exercised.
    gamma = 1.0 + 0.1 * jax.random.normal(kg, (H,), dtype=jnp.float32)
    beta = 0.1 * jax.random.normal(kb, (H,), dtype=jnp.float32)

    out = layer_norm(x, gamma, beta, eps=1e-6)
    out = jax.block_until_ready(out)

    ref = layer_norm_reference(x, gamma, beta, eps=1e-6)
    assert out.shape == x.shape
    # rtol slightly relaxed to cover the EUP approx-reciprocal + single Newton
    # step (worst-case ~1e-5 relative); typically agrees to ~1e-7.
    assert jnp.allclose(out, ref, atol=1e-5, rtol=1e-4), "mismatch vs reference"

    print("KERNEL_OK")
</pallas_src>

<mosaic_0001>
module attributes {stable_mosaic.version = 11 : i64} {
  func.func @layer_norm_kernel(%arg0: i32, %arg1: memref<16x128xf32, #tpu.memory_space<vmem>>, %arg2: memref<1x128xf32, #tpu.memory_space<vmem>>, %arg3: memref<1x128xf32, #tpu.memory_space<vmem>>, %arg4: memref<16x128xf32, #tpu.memory_space<vmem>>) attributes {dimension_semantics = [#tpu.dimension_semantics<parallel>], iteration_bounds = array<i64: 1>, scalar_prefetch = 0 : i64, scratch_operands = 0 : i64, tpu.core_type = #tpu.core_type<tc>, window_params = [{transform_indices = @transform_0, window_bounds = array<i64: 16, 128>}, {pipeline_mode = #tpu.pipeline_mode<synchronous>, transform_indices = @transform_1, window_bounds = array<i64: 1, 128>}, {pipeline_mode = #tpu.pipeline_mode<synchronous>, transform_indices = @transform_2, window_bounds = array<i64: 1, 128>}, {transform_indices = @transform_3, window_bounds = array<i64: 16, 128>}]} {
    %c0 = arith.constant 0 : index
    %c0_0 = arith.constant 0 : index
    %0 = vector.load %arg1[%c0, %c0_0] : memref<16x128xf32, #tpu.memory_space<vmem>>, vector<16x128xf32>
    %c0_1 = arith.constant 0 : index
    %c0_2 = arith.constant 0 : index
    %1 = vector.load %arg2[%c0_1, %c0_2] : memref<1x128xf32, #tpu.memory_space<vmem>>, vector<1x128xf32>
    %c0_3 = arith.constant 0 : index
    %c0_4 = arith.constant 0 : index
    %2 = vector.load %arg3[%c0_3, %c0_4] : memref<1x128xf32, #tpu.memory_space<vmem>>, vector<1x128xf32>
    %cst = arith.constant dense<0.000000e+00> : vector<16xf32>
    %3 = vector.multi_reduction <add>, %0, %cst [1] : vector<16x128xf32> to vector<16xf32>
    %4 = vector.shape_cast %3 : vector<16xf32> to vector<16x1xf32>
    %cst_5 = arith.constant 1.280000e+02 : f32
    %5 = vector.broadcast %cst_5 : f32 to vector<16x1xf32>
    %6 = arith.divf %4, %5 : vector<16x1xf32>
    %7 = vector.broadcast %6 : vector<16x1xf32> to vector<16x128xf32>
    %8 = arith.subf %0, %7 : vector<16x128xf32>
    %9 = arith.mulf %8, %8 : vector<16x128xf32>
    %cst_6 = arith.constant dense<0.000000e+00> : vector<16xf32>
    %10 = vector.multi_reduction <add>, %9, %cst_6 [1] : vector<16x128xf32> to vector<16xf32>
    %11 = vector.shape_cast %10 : vector<16xf32> to vector<16x1xf32>
    %cst_7 = arith.constant 1.270000e+02 : f32
    %12 = vector.broadcast %cst_7 : f32 to vector<16x1xf32>
    %13 = arith.divf %11, %12 : vector<16x1xf32>
    %14 = math.sqrt %13 : vector<16x1xf32>
    %cst_8 = arith.constant 9.99999997E-7 : f32
    %15 = vector.broadcast %cst_8 : f32 to vector<16x1xf32>
    %16 = arith.addf %14, %15 : vector<16x1xf32>
    %17 = tpu.reciprocal %16 {approx = true} : vector<16x1xf32> -> vector<16x1xf32>
    %18 = arith.mulf %16, %17 : vector<16x1xf32>
    %cst_9 = arith.constant 2.000000e+00 : f32
    %19 = vector.broadcast %cst_9 : f32 to vector<16x1xf32>
    %20 = arith.subf %19, %18 : vector<16x1xf32>
    %21 = arith.mulf %17, %20 : vector<16x1xf32>
    %22 = vector.broadcast %21 : vector<16x1xf32> to vector<16x128xf32>
    %23 = arith.mulf %8, %22 : vector<16x128xf32>
    %24 = vector.broadcast %1 : vector<1x128xf32> to vector<16x128xf32>
    %25 = arith.mulf %24, %23 : vector<16x128xf32>
    %26 = vector.broadcast %2 : vector<1x128xf32> to vector<16x128xf32>
    %27 = arith.addf %25, %26 : vector<16x128xf32>
    %c0_10 = arith.constant 0 : index
    %c0_11 = arith.constant 0 : index
    %28 = vector.load %arg4[%c0_10, %c0_11] : memref<16x128xf32, #tpu.memory_space<vmem>>, vector<16x128xf32>
    tpu.vector_store %arg4[%c0_10, %c0_11], %27 {strides = array<i32>} : memref<16x128xf32, #tpu.memory_space<vmem>>, vector<16x128xf32>,
    return
  }
  func.func @transform_0(%arg0: i32) -> (i32, i32) {
    %c0_i32 = arith.constant 0 : i32
    %c0_i32_0 = arith.constant 0 : i32
    return %arg0, %c0_i32 : i32, i32
  }
  func.func @transform_1(%arg0: i32) -> (i32, i32) {
    %c0_i32 = arith.constant 0 : i32
    %c0_i32_0 = arith.constant 0 : i32
    %c0_i32_1 = arith.constant 0 : i32
    return %c0_i32, %c0_i32_0 : i32, i32
  }
  func.func @transform_2(%arg0: i32) -> (i32, i32) {
    %c0_i32 = arith.constant 0 : i32
    %c0_i32_0 = arith.constant 0 : i32
    %c0_i32_1 = arith.constant 0 : i32
    return %c0_i32, %c0_i32_0 : i32, i32
  }
  func.func @transform_3(%arg0: i32) -> (i32, i32) {
    %c0_i32 = arith.constant 0 : i32
    %c0_i32_0 = arith.constant 0 : i32
    return %arg0, %c0_i32 : i32, i32
  }
}

</mosaic_0001>

<llo_original>
// kernel: tpu_custom_call.1
$region0: #{tpu_custom_call.1}
  #allocation0 [shape = 'u32[]', space=smem, size = 0x4, offset = 0x4, fixed_abs, tag = 'smem constant byte address 0x4 - core index']
  #allocation1 [shape = 'u32[72,128]{1,0:T(1,128)}', space=vmem, size = 0x9000, scoped, tag = 'internal scratch']
  %s0 = inlined_call_operand.hbm [shape: f32[16,128], index: 0, kind: input, shape index: {}]
  %s1 = inlined_call_operand.hbm [shape: f32[1,128], index: 1, kind: input, shape index: {}]
  %s2 = inlined_call_operand.vmem [shape: f32[1,128], index: 2, kind: input, shape index: {}]
  %s3 = inlined_call_operand.hbm [shape: f32[16,128], index: 3, kind: output, shape index: {}]
  %s4 = sld [smem:[#allocation0]]
  $region30: #{tpu_custom_call.1} parent=0
    _
  %s6 = ssub.s32 1, %s4
  %s7 = scalar_select 0, %s6, %s4
  $region1: #{tpu_custom_call.1} parent=0
    #allocation2 [shape = 'u8[8192]{0}', space=vmem, size = 0x2000, scoped, tag = 'input window, operand 0, single buffered']
    #allocation3 [shape = 's32[1]{0}', space=sflag, size = 0x4, scoped, tag = 'scoped memory for tpu_custom_call.1']
    #allocation4 [shape = 's32[1]{0}', space=sflag, size = 0x4, scoped, tag = 'scoped memory for tpu_custom_call.1']
    #allocation5 [shape = 'u8[512]{0}', space=vmem, size = 0x400, scoped, tag = 'input window, operand 1, single buffered']
    #allocation6 [shape = 's32[1]{0}', space=sflag, size = 0x4, scoped, tag = 'scoped memory for tpu_custom_call.1']
    #allocation7 [shape = 'u8[8192]{0}', space=vmem, size = 0x2000, scoped, tag = 'output window, operand 0, single buffered']
    %8 = vsyncpa [#allocation3], 0
    %9 = vsyncpa [#allocation6], 0
    %10 = vsyncpa [#allocation4], 0
    // Predicated region
    $region2: #{tpu_custom_call.1} parent=1 // pred_check
      _
    $region3: #{tpu_custom_call.1} parent=1 // pred_check_branch
      %12 = sbr.rel (0) target = $region5
    $region4: #{tpu_custom_call.1} parent=1 // pred_region
      %14 = vsyncadd [#allocation3], 0
      %s15 = sshll.u32 %s0, 4
      %s16 = int_to_ptr.hbm [resolvable:$true] %s15
      %s17 = sshll.u32 [#allocation2], 4
      %s18 = int_to_ptr.vmem [resolvable:$true] %s17
      %23 = dma.hbm_to_vmem [thread:$0]  %s16, 256, %s18, [#allocation3], 128, 128, 8
    $region5: #{tpu_custom_call.1} parent=1 // pred_fallthru
      _
    // Predicated region
    $region6: #{tpu_custom_call.1} parent=1 // pred_check
      _
    $region7: #{tpu_custom_call.1} parent=1 // pred_check_branch
      %25 = sbr.rel (0) target = $region9
    $region8: #{tpu_custom_call.1} parent=1 // pred_region
      %27 = vsyncadd [#allocation6], 0
      %s29 = sshll.u32 %s1, 4
      %s30 = int_to_ptr.hbm [resolvable:$true] %s29
      %s31 = sshll.u32 [#allocation5], 4
      %s32 = int_to_ptr.vmem [resolvable:$true] %s31
      %34 = dma.hbm_to_vmem [thread:$0]  %s30, 16, %s32, [#allocation6]
    $region9: #{tpu_custom_call.1} parent=1 // pred_fallthru
      _
    // Predicated region
    $region10: #{tpu_custom_call.1} parent=1 // pred_check
      _
    $region11: #{tpu_custom_call.1} parent=1 // pred_check_branch
      %36 = sbr.rel (0) target = $region13
    $region12: #{tpu_custom_call.1} parent=1 // pred_region
      _
    $region13: #{tpu_custom_call.1} parent=1 // pred_fallthru
      _
    // Predicated region
    $region14: #{tpu_custom_call.1} parent=1 // pred_check
      _
    $region15: #{tpu_custom_call.1} parent=1 // pred_check_branch
      %38 = sbr.rel (0) target = $region17
    $region16: #{tpu_custom_call.1} parent=1 // pred_region
      %40 = dma.done [#allocation3], 256
    $region17: #{tpu_custom_call.1} parent=1 // pred_fallthru
      _
    // Predicated region
    $region18: #{tpu_custom_call.1} parent=1 // pred_check
      _
    $region19: #{tpu_custom_call.1} parent=1 // pred_check_branch
      %42 = sbr.rel (0) target = $region21
    $region20: #{tpu_custom_call.1} parent=1 // pred_region
      %44 = dma.done [#allocation6], 16
    $region21: #{tpu_custom_call.1} parent=1 // pred_fallthru
      _
    %v45 = vld [vmem:[#allocation2] sm:$0xff]
    %v46 = vld [vmem:[#allocation2 + $0x8] sm:$0xff]
    %v47 = vld [vmem:[#allocation5] sm:$0x1]
    %v48 = vld [vmem:[%s2] sm:$0x1]
    %49 = vadd.xlane.f32.xlu0 %v45
    %v50 = vpop.xlane.xlu0 %49
    %51 = vadd.xlane.f32.xlu0 %v46
    %v52 = vpop.xlane.xlu0 %51
    %v53 = vrcp.pop 128.0
    %v54 = vmul.f32 128.0, %v53
    %v55 = vsub.f32 1.0, %v54
    %v56 = vmul.f32 %v53, %v55
    %v57 = vadd.f32 %v53, %v56
    %vm58 = vweird.f32 %v53
    %v59 = vsel %vm58, %v53, %v57
    %v60 = vmul.f32 %v50, %v59
    %v61 = vmul.f32 %v52, %v59
    %v62 = vsub.f32 %v45, %v60
    %v63 = vsub.f32 %v46, %v61
    %v64 = vmul.f32 %v62, %v62
    %v65 = vmul.f32 %v63, %v63
    %66 = vadd.xlane.f32.xlu0 %v64
    %v67 = vpop.xlane.xlu0 %66
    %68 = vadd.xlane.f32.xlu0 %v65
    %v69 = vpop.xlane.xlu0 %68
    %v70 = vrcp.pop 127.0
    %v71 = vmul.f32 127.0, %v70
    %v72 = vsub.f32 1.0, %v71
    %v73 = vmul.f32 %v70, %v72
    %v74 = vadd.f32 %v70, %v73
    %vm75 = vweird.f32 %v70
    %v76 = vsel %vm75, %v70, %v74
    %v77 = vmul.f32 %v67, %v76
    %v78 = vmul.f32 %v69, %v76
    %v79 = vrsqrt.pop %v77
    %v80 = vmul.f32 %v79, %v77
    %v81 = vmul.f32 %v80, %v79
    %v82 = vmul.f32 0.5, %v81
    %v83 = vsub.f32 1.5, %v82
    %v84 = vmul.f32 %v79, %v83
    %v85 = vmul.f32 %v77, %v84
    %vm86 = vcmp.eq.f32.partialorder %v77, inf
    %v87 = vsel %vm86, %v77, %v85
    %vm88 = vcmp.eq.f32.partialorder %v77, 0.0
    %v89 = vand.u32 %v77, 2147483648
    %v90 = vsel %vm88, %v89, %v87
    %v91 = vrsqrt.pop %v78
    %v92 = vmul.f32 %v91, %v78
    %v93 = vmul.f32 %v92, %v91
    %v94 = vmul.f32 0.5, %v93
    %v95 = vsub.f32 1.5, %v94
    %v96 = vmul.f32 %v91, %v95
    %v97 = vmul.f32 %v78, %v96
    %vm98 = vcmp.eq.f32.partialorder %v78, inf
    %v99 = vsel %vm98, %v78, %v97
    %vm100 = vcmp.eq.f32.partialorder %v78, 0.0
    %v101 = vand.u32 %v78, 2147483648
    %v102 = vsel %vm100, %v101, %v99
    %v103 = vadd.f32 %v90, 1e-06
    %v104 = vadd.f32 %v102, 1e-06
    %v105 = vrcp.pop %v103
    %v106 = vrcp.pop %v104
    %v107 = vmul.f32 %v103, %v105
    %v108 = vmul.f32 %v104, %v106
    %v109 = vsub.f32 2.0, %v107
    %v110 = vsub.f32 2.0, %v108
    %v111 = vmul.f32 %v105, %v109
    %v112 = vmul.f32 %v106, %v110
    %v113 = vmul.f32 %v62, %v111
    %v114 = vmul.f32 %v63, %v112
    %v116 = vperm.slane %v47, 0
    %v118 = vmul.f32 %v116, %v113
    %v119 = vmul.f32 %v116, %v114
    %v121 = vperm.slane %v48, 0
    %v123 = vadd.f32 %v118, %v121
    %v124 = vadd.f32 %v119, %v121
    %125 = vst [vmem:[#allocation7] sm:$0xff] %v123
    %126 = vst [vmem:[#allocation7 + $0x8] sm:$0xff] %v124
    // Predicated region
    $region22: #{tpu_custom_call.1} parent=1 // pred_check
      _
    $region23: #{tpu_custom_call.1} parent=1 // pred_check_branch
      %128 = sbr.rel (0) target = $region25
    $region24: #{tpu_custom_call.1} parent=1 // pred_region
      %130 = vsyncadd [#allocation4], 0
      %s131 = sshll.u32 [#allocation7], 4
      %s132 = int_to_ptr.vmem [resolvable:$true] %s131
      %s133 = sshll.u32 %s3, 4
      %s134 = int_to_ptr.hbm [resolvable:$true] %s133
      %139 = dma.vmem_to_hbm [thread:$0]  %s132, 256, %s134, [#allocation4], 128, 128, 8
    $region25: #{tpu_custom_call.1} parent=1 // pred_fallthru
      _
    // Predicated region
    $region26: #{tpu_custom_call.1} parent=1 // pred_check
      _
    $region27: #{tpu_custom_call.1} parent=1 // pred_check_branch
      %141 = sbr.rel (0) target = $region29
    $region28: #{tpu_custom_call.1} parent=1 // pred_region
      %143 = dma.done [#allocation4], 256
    $region29: #{tpu_custom_call.1} parent=1 // pred_fallthru
      _
    %144 = vsyncpa [#allocation3], 1
    %145 = vsyncpa [#allocation6], 1
    %146 = vsyncpa [#allocation4], 1

</llo_original>
